<compile_context>
chip_gen: v7x
topology: tpu7x:2x2x1
jax: 0.10.0
libtpu: 0.0.40
codegen_flags: <defaults>
</compile_context>

<pallas_src>
import functools

import jax
import jax.numpy as jnp
from jax.experimental import pallas as pl
from jax.experimental.pallas import tpu as pltpu


def _round_up(x, m):
    return ((x + m - 1) // m) * m


def _readout_kernel(x_ref, w_ref, b_ref, mlo_ref, mup_ref, out_ref, *, nn_pad):
    # x_ref : (TB, F)          bf16
    # w_ref : (F, 2*NN_pad)    bf16  = [W^T_padded | W^T_perm_padded]
    # b_ref : (1, 2*NN_pad)    f32   = [bias_padded | bias_perm_padded]
    # mlo/mup: (1, NN_pad)     f32   0/1 masks for strict lower / upper triangle
    logits = jnp.dot(x_ref[...], w_ref[...],
                     preferred_element_type=jnp.float32) + b_ref[...]
    s = jax.nn.sigmoid(logits)            # f32, (TB, 2*NN_pad)
    s_lo = s[:, :nn_pad]                  # sigmoid(logits), flat (row-major)
    s_tr = s[:, nn_pad:]                  # sigmoid(logits) transposed, flat
    # zero_and_symmetrize: strict lower triangle + its transpose (diag -> 0)
    out_ref[...] = (mlo_ref[...] * s_lo + mup_ref[...] * s_tr).astype(out_ref.dtype)


def noneq_edge_readout(x, w, bias, max_N, *, block_b=128):
    """x: (B, feat_dim); w: (max_N*max_N, feat_dim) PyTorch Linear layout; bias: (max_N*max_N,)."""
    B, F = x.shape
    NN = max_N * max_N
    assert w.shape == (NN, F) and bias.shape == (NN,)

    # --- wrapper-side constant prep (layout plumbing, runs once under jit) ---
    k = jnp.arange(NN)
    row = k // max_N
    col = k - row * max_N
    # Column permutation that realizes the flat per-sample matrix transpose:
    # logits_T_flat[:, k] = logits_flat[:, (k % N)*N + (k // N)]
    src = col * max_N + row

    w_t = jnp.asarray(w, jnp.float32).T            # (F, NN)
    w_t_perm = w_t[:, src]                         # (F, NN)
    b_f32 = jnp.asarray(bias, jnp.float32)
    b_perm = b_f32[src]

    # Pad each half of the lane dimension up to a multiple of 128 (lane-dense
    # stores + 128-aligned in-kernel split).
    NN_pad = max(128, _round_up(NN, 128))
    pad_n = NN_pad - NN

    w_cat = jnp.concatenate(
        [jnp.pad(w_t, ((0, 0), (0, pad_n))),
         jnp.pad(w_t_perm, ((0, 0), (0, pad_n)))], axis=1).astype(jnp.bfloat16)
    b_cat = jnp.concatenate(
        [jnp.pad(b_f32, (0, pad_n)),
         jnp.pad(b_perm, (0, pad_n))]).reshape(1, 2 * NN_pad)

    m_lo = jnp.pad((row > col).astype(jnp.float32), (0, pad_n)).reshape(1, NN_pad)
    m_up = jnp.pad((col > row).astype(jnp.float32), (0, pad_n)).reshape(1, NN_pad)

    # Batch tiling: full-fill the MXU rows when B is large, single block otherwise.
    tb = 128 if B > 128 else _round_up(B, 8)
    B_pad = _round_up(B, tb)
    x_p = jnp.pad(jnp.asarray(x, jnp.float32), ((0, B_pad - B), (0, 0))).astype(jnp.bfloat16)

    kernel = functools.partial(_readout_kernel, nn_pad=NN_pad)
    out_flat = pl.pallas_call(
        kernel,
        out_shape=jax.ShapeDtypeStruct((B_pad, NN_pad), jnp.float32),
        grid=(B_pad // tb,),
        in_specs=[
            pl.BlockSpec((tb, F), lambda i: (i, 0)),            # X tile (pipelined)
            pl.BlockSpec((F, 2 * NN_pad), lambda i: (0, 0)),    # weights (resident)
            pl.BlockSpec((1, 2 * NN_pad), lambda i: (0, 0)),    # bias (resident)
            pl.BlockSpec((1, NN_pad), lambda i: (0, 0)),        # lower-tri mask
            pl.BlockSpec((1, NN_pad), lambda i: (0, 0)),        # upper-tri mask
        ],
        out_specs=pl.BlockSpec((tb, NN_pad), lambda i: (i, 0)),
        compiler_params=pltpu.CompilerParams(
            dimension_semantics=("parallel",)),
    )(x_p, w_cat, b_cat, m_lo, m_up)

    return out_flat[:B, :NN].reshape(B, max_N, max_N)


def _reference(x, w, bias, max_N):
    logits = (x @ w.T + bias).reshape(-1, max_N, max_N)
    s = jax.nn.sigmoid(logits)
    tri = jnp.tril(s, k=-1)
    return tri + jnp.swapaxes(tri, -1, -2)


if __name__ == "__main__":
    B, feat_dim, max_N = 4, 32, 8

    key = jax.random.PRNGKey(0)
    kx, kw, kb = jax.random.split(key, 3)

    x = jax.random.normal(kx, (B, feat_dim), dtype=jnp.float32)
    # Deterministic init mimicking nn.Linear (uniform +/- 1/sqrt(fan_in)).
    bound = 1.0 / (feat_dim ** 0.5)
    w = jax.random.uniform(kw, (max_N * max_N, feat_dim), jnp.float32, -bound, bound)
    bias = jax.random.uniform(kb, (max_N * max_N,), jnp.float32, -bound, bound)

    out = noneq_edge_readout(x, w, bias, max_N)
    out = jax.block_until_ready(out)

    ref = _reference(x, w, bias, max_N)
    assert out.shape == (B, max_N, max_N)
    # bf16 MXU path: tolerance loosened accordingly (outputs are in [0, 1]).
    assert jnp.max(jnp.abs(out - ref)) < 5e-2, "mismatch vs reference"
    # structural checks: symmetric with zero diagonal
    assert jnp.allclose(out, jnp.swapaxes(out, -1, -2))
    assert jnp.allclose(jnp.diagonal(out, axis1=-2, axis2=-1), 0.0)

    print("KERNEL_OK")
</pallas_src>

<mosaic_0001>
module attributes {stable_mosaic.version = 11 : i64} {
  func.func @_readout_kernel(%arg0: i32, %arg1: memref<8x32xbf16, #tpu.memory_space<vmem>>, %arg2: memref<32x256xbf16, #tpu.memory_space<vmem>>, %arg3: memref<1x256xf32, #tpu.memory_space<vmem>>, %arg4: memref<1x128xf32, #tpu.memory_space<vmem>>, %arg5: memref<1x128xf32, #tpu.memory_space<vmem>>, %arg6: memref<8x128xf32, #tpu.memory_space<vmem>>) attributes {dimension_semantics = [#tpu.dimension_semantics<parallel>], iteration_bounds = array<i64: 1>, scalar_prefetch = 0 : i64, scratch_operands = 0 : i64, tpu.core_type = #tpu.core_type<tc>, window_params = [{transform_indices = @transform_0, window_bounds = array<i64: 8, 32>}, {pipeline_mode = #tpu.pipeline_mode<synchronous>, transform_indices = @transform_1, window_bounds = array<i64: 32, 256>}, {pipeline_mode = #tpu.pipeline_mode<synchronous>, transform_indices = @transform_2, window_bounds = array<i64: 1, 256>}, {pipeline_mode = #tpu.pipeline_mode<synchronous>, transform_indices = @transform_3, window_bounds = array<i64: 1, 128>}, {pipeline_mode = #tpu.pipeline_mode<synchronous>, transform_indices = @transform_4, window_bounds = array<i64: 1, 128>}, {transform_indices = @transform_5, window_bounds = array<i64: 8, 128>}]} {
    %c0 = arith.constant 0 : index
    %c0_0 = arith.constant 0 : index
    %0 = vector.load %arg1[%c0, %c0_0] : memref<8x32xbf16, #tpu.memory_space<vmem>>, vector<8x32xbf16>
    %c0_1 = arith.constant 0 : index
    %c0_2 = arith.constant 0 : index
    %1 = vector.load %arg2[%c0_1, %c0_2] : memref<32x256xbf16, #tpu.memory_space<vmem>>, vector<32x256xbf16>
    %cst = arith.constant dense<0.000000e+00> : vector<8x256xf32>
    %2 = tpu.matmul %0, %1, %cst {dimension_numbers = #tpu.dot_dimension_numbers<[1], [0], [0], [1], [0, 0, 1, 1], [], []>} : vector<8x32xbf16>, vector<32x256xbf16>, vector<8x256xf32> -> vector<8x256xf32>
    %c0_3 = arith.constant 0 : index
    %c0_4 = arith.constant 0 : index
    %3 = vector.load %arg3[%c0_3, %c0_4] : memref<1x256xf32, #tpu.memory_space<vmem>>, vector<1x256xf32>
    %4 = vector.broadcast %3 : vector<1x256xf32> to vector<8x256xf32>
    %5 = arith.addf %2, %4 : vector<8x256xf32>
    %6 = arith.negf %5 : vector<8x256xf32>
    %7 = math.exp %6 : vector<8x256xf32>
    %cst_5 = arith.constant 1.000000e+00 : f32
    %8 = vector.broadcast %cst_5 : f32 to vector<8x256xf32>
    %9 = arith.addf %8, %7 : vector<8x256xf32>
    %10 = arith.divf %8, %9 : vector<8x256xf32>
    %11 = vector.extract_strided_slice %10 {offsets = [0, 0], sizes = [8, 128], strides = [1, 1]} : vector<8x256xf32> to vector<8x128xf32>
    %12 = vector.extract_strided_slice %10 {offsets = [0, 128], sizes = [8, 128], strides = [1, 1]} : vector<8x256xf32> to vector<8x128xf32>
    %c0_6 = arith.constant 0 : index
    %c0_7 = arith.constant 0 : index
    %13 = vector.load %arg4[%c0_6, %c0_7] : memref<1x128xf32, #tpu.memory_space<vmem>>, vector<1x128xf32>
    %14 = vector.broadcast %13 : vector<1x128xf32> to vector<8x128xf32>
    %15 = arith.mulf %14, %11 : vector<8x128xf32>
    %c0_8 = arith.constant 0 : index
    %c0_9 = arith.constant 0 : index
    %16 = vector.load %arg5[%c0_8, %c0_9] : memref<1x128xf32, #tpu.memory_space<vmem>>, vector<1x128xf32>
    %17 = vector.broadcast %16 : vector<1x128xf32> to vector<8x128xf32>
    %18 = arith.mulf %17, %12 : vector<8x128xf32>
    %19 = arith.addf %15, %18 : vector<8x128xf32>
    %c0_10 = arith.constant 0 : index
    %c0_11 = arith.constant 0 : index
    %20 = vector.load %arg6[%c0_10, %c0_11] : memref<8x128xf32, #tpu.memory_space<vmem>>, vector<8x128xf32>
    tpu.vector_store %arg6[%c0_10, %c0_11], %19 {strides = array<i32>} : memref<8x128xf32, #tpu.memory_space<vmem>>, vector<8x128xf32>,
    return
  }
  func.func @transform_0(%arg0: i32) -> (i32, i32) {
    %c0_i32 = arith.constant 0 : i32
    %c0_i32_0 = arith.constant 0 : i32
    return %arg0, %c0_i32 : i32, i32
  }
  func.func @transform_1(%arg0: i32) -> (i32, i32) {
    %c0_i32 = arith.constant 0 : i32
    %c0_i32_0 = arith.constant 0 : i32
    %c0_i32_1 = arith.constant 0 : i32
    return %c0_i32, %c0_i32_0 : i32, i32
  }
  func.func @transform_2(%arg0: i32) -> (i32, i32) {
    %c0_i32 = arith.constant 0 : i32
    %c0_i32_0 = arith.constant 0 : i32
    %c0_i32_1 = arith.constant 0 : i32
    return %c0_i32, %c0_i32_0 : i32, i32
  }
  func.func @transform_3(%arg0: i32) -> (i32, i32) {
    %c0_i32 = arith.constant 0 : i32
    %c0_i32_0 = arith.constant 0 : i32
    %c0_i32_1 = arith.constant 0 : i32
    return %c0_i32, %c0_i32_0 : i32, i32
  }
  func.func @transform_4(%arg0: i32) -> (i32, i32) {
    %c0_i32 = arith.constant 0 : i32
    %c0_i32_0 = arith.constant 0 : i32
    %c0_i32_1 = arith.constant 0 : i32
    return %c0_i32, %c0_i32_0 : i32, i32
  }
  func.func @transform_5(%arg0: i32) -> (i32, i32) {
    %c0_i32 = arith.constant 0 : i32
    %c0_i32_0 = arith.constant 0 : i32
    return %arg0, %c0_i32 : i32, i32
  }
}

</mosaic_0001>

<llo_original>
// kernel: tpu_custom_call.1
$region0: #{tpu_custom_call.1}
  #allocation0 [shape = 'u32[]', space=smem, size = 0x4, offset = 0x4, fixed_abs, tag = 'smem constant byte address 0x4 - core index']
  #allocation1 [shape = 'u32[144,128]{1,0:T(1,128)}', space=vmem, size = 0x12000, scoped, tag = 'internal scratch']
  %s0 = inlined_call_operand.hbm [shape: bf16[8,32], index: 0, kind: input, shape index: {}]
  %s1 = inlined_call_operand.hbm [shape: bf16[32,256], index: 1, kind: input, shape index: {}]
  %s2 = inlined_call_operand.vmem [shape: f32[1,256], index: 2, kind: input, shape index: {}]
  %s3 = inlined_call_operand.vmem [shape: f32[1,128], index: 3, kind: input, shape index: {}]
  %s4 = inlined_call_operand.vmem [shape: f32[1,128], index: 4, kind: input, shape index: {}]
  %s5 = inlined_call_operand.hbm [shape: f32[8,128], index: 5, kind: output, shape index: {}]
  %s6 = sld [smem:[#allocation0]]
  $region38: #{tpu_custom_call.1} parent=0
    _
  %s8 = ssub.s32 1, %s6
  %s9 = scalar_select 0, %s8, %s6
  $region1: #{tpu_custom_call.1} parent=0
    #allocation2 [shape = 'u8[2048]{0}', space=vmem, size = 0x800, scoped, tag = 'input window, operand 0, single buffered']
    #allocation3 [shape = 's32[1]{0}', space=sflag, size = 0x4, scoped, tag = 'scoped memory for tpu_custom_call.1']
    #allocation4 [shape = 's32[1]{0}', space=sflag, size = 0x4, scoped, tag = 'scoped memory for tpu_custom_call.1']
    #allocation5 [shape = 'u8[16384]{0}', space=vmem, size = 0x4000, scoped, tag = 'input window, operand 1, single buffered']
    #allocation6 [shape = 's32[1]{0}', space=sflag, size = 0x4, scoped, tag = 'scoped memory for tpu_custom_call.1']
    #allocation7 [shape = 'u8[4096]{0}', space=vmem, size = 0x1000, scoped, tag = 'output window, operand 0, single buffered']
    %10 = vsyncpa [#allocation3], 0
    %11 = vsyncpa [#allocation6], 0
    %12 = vsyncpa [#allocation4], 0
    // Predicated region
    $region2: #{tpu_custom_call.1} parent=1 // pred_check
      _
    $region3: #{tpu_custom_call.1} parent=1 // pred_check_branch
      %14 = sbr.rel (0) target = $region5
    $region4: #{tpu_custom_call.1} parent=1 // pred_region
      %s16 = ssub.s32 64, 64
      %17 = vsyncadd [#allocation3], %s16
      %s19 = sshll.u32 [#allocation2], 4
      %s20 = int_to_ptr.vmem [resolvable:$true] %s19
      %22 = dma.hbm_to_vmem [thread:$0]  %s0, 64, %s20, [#allocation3]
    $region5: #{tpu_custom_call.1} parent=1 // pred_fallthru
      _
    // Predicated region
    $region6: #{tpu_custom_call.1} parent=1 // pred_check
      _
    $region7: #{tpu_custom_call.1} parent=1 // pred_check_branch
      %24 = sbr.rel (0) target = $region9
    $region8: #{tpu_custom_call.1} parent=1 // pred_region
      %s26 = ssub.s32 512, 512
      %27 = vsyncadd [#allocation6], %s26
      %s28 = sshll.u32 [#allocation5], 4
      %s29 = int_to_ptr.vmem [resolvable:$true] %s28
      %34 = dma.hbm_to_vmem [thread:$0]  %s1, 512, %s29, [#allocation6], 128, 128, 8
    $region9: #{tpu_custom_call.1} parent=1 // pred_fallthru
      _
    // Predicated region
    $region10: #{tpu_custom_call.1} parent=1 // pred_check
      _
    $region11: #{tpu_custom_call.1} parent=1 // pred_check_branch
      %36 = sbr.rel (0) target = $region13
    $region12: #{tpu_custom_call.1} parent=1 // pred_region
      _
    $region13: #{tpu_custom_call.1} parent=1 // pred_fallthru
      _
    // Predicated region
    $region14: #{tpu_custom_call.1} parent=1 // pred_check
      _
    $region15: #{tpu_custom_call.1} parent=1 // pred_check_branch
      %38 = sbr.rel (0) target = $region17
    $region16: #{tpu_custom_call.1} parent=1 // pred_region
      _
    $region17: #{tpu_custom_call.1} parent=1 // pred_fallthru
      _
    // Predicated region
    $region18: #{tpu_custom_call.1} parent=1 // pred_check
      _
    $region19: #{tpu_custom_call.1} parent=1 // pred_check_branch
      %40 = sbr.rel (0) target = $region21
    $region20: #{tpu_custom_call.1} parent=1 // pred_region
      _
    $region21: #{tpu_custom_call.1} parent=1 // pred_fallthru
      _
    // Predicated region
    $region22: #{tpu_custom_call.1} parent=1 // pred_check
      _
    $region23: #{tpu_custom_call.1} parent=1 // pred_check_branch
      %42 = sbr.rel (0) target = $region25
    $region24: #{tpu_custom_call.1} parent=1 // pred_region
      %43 = dma.done [#allocation3], 64
    $region25: #{tpu_custom_call.1} parent=1 // pred_fallthru
      _
    // Predicated region
    $region26: #{tpu_custom_call.1} parent=1 // pred_check
      _
    $region27: #{tpu_custom_call.1} parent=1 // pred_check_branch
      %45 = sbr.rel (0) target = $region29
    $region28: #{tpu_custom_call.1} parent=1 // pred_region
      %46 = dma.done [#allocation6], 512
    $region29: #{tpu_custom_call.1} parent=1 // pred_fallthru
      _
    %v48 = vld [vmem:[#allocation2] sm:$0xf]
    %v49 = vld [vmem:[#allocation5] sm:$0xff]
    %v50 = vld [vmem:[#allocation5 + $0x8] sm:$0xff]
    %v51 = vld [vmem:[#allocation5 + $0x10] sm:$0xff]
    %v52 = vld [vmem:[#allocation5 + $0x18] sm:$0xff]
    %v53 = vld [vmem:[%s2] sm:$0x3]
    %v55 = vlaneseq
    %v56 = vshrl.u32 %v55, 7
    %v57 = vsub.s32 0, %v56
    %v58 = vrot.slane %v53, %v57
    %v59 = vlaneseq
    %v60 = vshrl.u32 %v59, 7
    %v61 = vsub.s32 1, %v60
    %v62 = vrot.slane %v53, %v61
    %v69 = vunpack.c.l.b16 %v49
    %v70 = vunpack.c.h.b16 %v49
    %v71 = vunpack.c.l.b16 %v50
    %v72 = vunpack.c.h.b16 %v50
    %v73 = vunpack.c.l.b16 %v51
    %v74 = vunpack.c.h.b16 %v51
    %v75 = vunpack.c.l.b16 %v52
    %v76 = vunpack.c.h.b16 %v52
    %v77 = vpack.c.b16 %v71, %v69
    %v78 = vpack.c.b16 %v72, %v70
    %v79 = vpack.c.b16 %v75, %v73
    %v80 = vpack.c.b16 %v76, %v74
    %vm85 = vcmask 261120
    %v87 = vsel %vm85, %v48, 0
    %89 = vmatprep.subr.bf16.mxu0 %v78
    %90 = vmatpush1.bf16.msra.mxu0 %v77
    %91 = vmatprep.subr.bf16.mxu0 %v80
    %92 = vmatpush1.bf16.msra.mxu0 %v79
    %93 = vmatprep.subr.bf16.mxu0 0
    %94 = vmatpush1.bf16.msra.mxu0 0
    %95 = vmatprep.subr.bf16.mxu0 0
    %96 = vmatpush1.bf16.msra.mxu0 0
    %97 = vmatprep.subr.bf16.mxu0 0
    %98 = vmatpush1.bf16.msra.mxu0 0
    %99 = vmatprep.subr.bf16.mxu0 0
    %100 = vmatpush1.bf16.msra.mxu0 0
    %101 = vmatprep.subr.bf16.mxu0 0
    %102 = vmatpush1.bf16.msra.mxu0 0
    %103 = vmatprep.subr.bf16.mxu0 0
    %104 = vmatpush1.bf16.msra.mxu0 0
    %105 = vmatprep.subr.bf16.mxu0 0
    %106 = vmatpush1.bf16.msra.mxu0 0
    %107 = vmatprep.subr.bf16.mxu0 0
    %108 = vmatpush1.bf16.msra.mxu0 0
    %109 = vmatprep.subr.bf16.mxu0 0
    %110 = vmatpush1.bf16.msra.mxu0 0
    %111 = vmatprep.subr.bf16.mxu0 0
    %112 = vmatpush1.bf16.msra.mxu0 0
    %113 = vmatprep.subr.bf16.mxu0 0
    %114 = vmatpush1.bf16.msra.mxu0 0
    %115 = vmatprep.subr.bf16.mxu0 0
    %116 = vmatpush1.bf16.msra.mxu0 0
    %117 = vmatprep.subr.bf16.mxu0 0
    %118 = vmatpush1.bf16.msra.mxu0 0
    %119 = vmatprep.subr.bf16.mxu0 0
    %120 = vmatpush1.bf16.msra.mxu0 0
    %121 = vmatprep.mubr.bf16.mxu0 0
    %122 = vmatmul.mubr.bf16.gmra.mrb[0].mxu0 %v87
    %v123 = vpop.f32.mrb[0].mxu0
    %v124 = vadd.f32 %v58, %v123
    %v125 = vpop.f32.mrb[0].mxu0
    %v126 = vadd.f32 %v62, %v125
    %v127 = vpop.f32.mrb[0].mxu0
    %v128 = vpop.f32.mrb[0].mxu0
    %129 = vdwg.mxu0
    %v130 = vxor.u32 %v124, 2147483648
    %v131 = vxor.u32 %v126, 2147483648
    %v132 = vmul.f32 %v130, 1.442695
    %v133 = vpow.pop %v132
    %v134 = vmul.f32 %v131, 1.442695
    %v135 = vpow.pop %v134
    %v136 = vadd.f32 %v133, 1.0
    %v137 = vadd.f32 %v135, 1.0
    %v138 = vrcp.pop %v136
    %v139 = vmul.f32 1.0, %v138
    %v140 = vrcp.pop %v137
    %v141 = vmul.f32 1.0, %v140
    %v142 = vld [vmem:[%s3] sm:$0x1]
    %v144 = vlaneseq
    %v145 = vshrl.u32 %v144, 7
    %v146 = vsub.s32 0, %v145
    %v147 = vrot.slane %v142, %v146
    %v149 = vmul.f32 %v147, %v139
    %v150 = vld [vmem:[%s4] sm:$0x1]
    %v152 = vlaneseq
    %v153 = vshrl.u32 %v152, 7
    %v154 = vsub.s32 0, %v153
    %v155 = vrot.slane %v150, %v154
    %v157 = vmul.f32 %v155, %v141
    %v158 = vadd.f32 %v149, %v157
    %159 = vst [vmem:[#allocation7] sm:$0xff] %v158
    // Predicated region
    $region30: #{tpu_custom_call.1} parent=1 // pred_check
      _
    $region31: #{tpu_custom_call.1} parent=1 // pred_check_branch
      %161 = sbr.rel (0) target = $region33
    $region32: #{tpu_custom_call.1} parent=1 // pred_region
      %s163 = ssub.s32 128, 128
      %164 = vsyncadd [#allocation4], %s163
      %s166 = sshll.u32 [#allocation7], 4
      %s167 = int_to_ptr.vmem [resolvable:$true] %s166
      %169 = dma.vmem_to_hbm [thread:$0]  %s167, 128, %s5, [#allocation4]
    $region33: #{tpu_custom_call.1} parent=1 // pred_fallthru
      _
    // Predicated region
    $region34: #{tpu_custom_call.1} parent=1 // pred_check
      _
    $region35: #{tpu_custom_call.1} parent=1 // pred_check_branch
      %171 = sbr.rel (0) target = $region37
    $region36: #{tpu_custom_call.1} parent=1 // pred_region
      %172 = dma.done [#allocation4], 128
    $region37: #{tpu_custom_call.1} parent=1 // pred_fallthru
      _
    %173 = vsyncpa [#allocation3], 1
    %174 = vsyncpa [#allocation6], 1
    %175 = vsyncpa [#allocation4], 1

</llo_original>
